<compile_context>
chip_gen: v6e
topology: v6e:2x2x1
jax: 0.10.0
libtpu: 0.0.40
codegen_flags: <defaults>
</compile_context>

<pallas_src>
import functools

import jax
import jax.numpy as jnp
import numpy as np
from jax import lax
from jax.experimental import pallas as pl
from jax.experimental.pallas import tpu as pltpu


def _clm_fused_kernel(refs_ref, y_ref, watt_ref, wft_ref, wfus_ref, out_ref,
                      *, H, W, C, G, M):
    """One packed group of G batch elements per grid step.

    refs_ref : [M, 1, G*C, P]  reference latents (P = H*W pixels in lanes,
                               sublane row j*C + ci = (batch j, channel ci))
    y_ref    : [1, G*C, P]
    watt_ref : [M*G, M*G*C+1]  block-diag folded attention weights; the last
                               column carries the folded attention bias
    wft_ref  : [G*C, G*C+G]    block-diag feature-transform weights; last G
                               columns apply b_ft to the per-batch gate sums
    wfus_ref : [G*C, 9*G*C+1]  block-diag 3x3 conv weights per tap; last
                               column = b_fus
    out_ref  : [1, G*C, P]
    """
    P = H * W
    GC = G * C
    f32 = jnp.float32

    ones_row = jnp.ones((1, P), f32)

    # ---- Stage 1a: attention logits for all refs / packed batches in ONE dot.
    #      att = (w_att @ w_ft) x + (w_att @ b_ft + b_att)   (1x1 convs folded)
    x_list = [refs_ref[m, 0].astype(f32) for m in range(M)]      # each [GC, P]
    x_aug = jnp.concatenate(x_list + [ones_row], axis=0)         # [M*GC+1, P]
    att = jnp.dot(watt_ref[...], x_aug,
                  preferred_element_type=f32)                    # [M*G, P]

    # ---- Stage 1b: softmax over the M refs + sigmoid gating (batched EUP).
    amax = att[0:G]
    for m in range(1, M):
        amax = jnp.maximum(amax, att[m * G:(m + 1) * G])
    e = jnp.exp(att - jnp.concatenate([amax] * M, axis=0))       # one exp call
    denom = e[0:G]
    for m in range(1, M):
        denom = denom + e[m * G:(m + 1) * G]
    inv = pl.reciprocal(denom, approx=True)                      # EUP slot
    inv = inv * (2.0 - denom * inv)                              # Newton step
    sg = jax.nn.sigmoid(att) * e                                 # one sigmoid

    # ---- Stage 1c: gated sum over refs, folded through the 1x1 conv:
    #   weighted_sum = W_ft (sum_m x_m g_m) + b_ft (sum_m g_m),
    #   g_m = sigmoid(att_m) * softmax_m(att)  (broadcast over channels).
    # Only O(1) intermediates stay live regardless of M (refs stay in VMEM).
    halves, gsums = [], []
    for j in range(G):                          # per packed batch element
        inv_j = inv[j:j + 1]
        acc_j = None
        gs_j = None
        for m in range(M):
            g_mj = sg[m * G + j:m * G + j + 1] * inv_j           # [1, P]
            x_mj = x_list[m][j * C:(j + 1) * C]                  # [C, P]
            term = x_mj * g_mj
            acc_j = term if acc_j is None else acc_j + term
            gs_j = g_mj if gs_j is None else gs_j + g_mj
        halves.append(acc_j)
        gsums.append(gs_j)
    dot_in = jnp.concatenate(halves + gsums, axis=0)             # [GC+G, P]
    xmid = y_ref[0].astype(f32) + jnp.dot(
        wft_ref[...], dot_in, preferred_element_type=f32)        # ws + y

    # ---- Stage 2: 3x3 conv (padding=1) + ReLU in the flat [GC, P] layout.
    # Each sublane row is one full image, so an XLU lane rotate + boundary
    # masks implement the spatial shift with SAME zero padding.
    pos = lax.broadcasted_iota(jnp.int32, (GC, P), 1)
    colw = pos % W
    taps = []
    for kh in range(3):
        for kw in range(3):
            dh, dw = kh - 1, kw - 1
            if dh == 0 and dw == 0:
                taps.append(xmid)
                continue
            s = dh * W + dw                          # flat source offset
            t = pltpu.roll(xmid, shift=(-s) % P, axis=1)  # t[:,p]=x[:,(p+s)%P]
            valid = (pos + s >= 0) & (pos + s < P)   # row-OOB / wrap mask
            if dw == -1:
                valid = valid & (colw >= 1)
            elif dw == 1:
                valid = valid & (colw <= W - 2)
            taps.append(jnp.where(valid, t, 0.0))
    t_aug = jnp.concatenate(taps + [ones_row], axis=0)           # [9*GC+1, P]
    out = jnp.dot(wfus_ref[...], t_aug, preferred_element_type=f32)
    out_ref[0] = jnp.maximum(out, 0.0).astype(out_ref.dtype)     # fused ReLU


# ----------------------------------------------------------------------------
# Wrapper
# ----------------------------------------------------------------------------
def simple_clm_forward(y, y_refs, params):
    """y: [B, C, H, W] (NCHW), y_refs: [M, B, C, H, W]. Returns [B, C, H, W]."""
    B, C, H, W = y.shape
    M = y_refs.shape[0]
    P = H * W
    # Pack pairs of batch elements into the sublane axis -> [2C=8, P] tiles.
    G = 2 if B % 2 == 0 else 1
    Bg = B // G
    GC = G * C
    f32 = jnp.float32

    # Pure reshapes (free): NCHW consumed directly, no transposes.
    y_p = y.reshape(Bg, GC, P)
    refs_p = y_refs.reshape(M, Bg, GC, P)

    w_ft = params["w_ft"].astype(f32)                       # [Cout, Cin]
    b_ft = params["b_ft"].astype(f32).reshape(C, 1)
    w_att = params["w_att"].astype(f32)                     # [1, Cin]
    b_att = params["b_att"].astype(f32).reshape(1, 1)
    w_fus = params["w_fus"].astype(f32)                     # [Cout, Cin, 3, 3]
    b_fus = params["b_fus"].astype(f32).reshape(C, 1)

    # Fold attention_conv through feature_transform:
    #   att = w_att (w_ft x + b_ft) + b_att = (w_att w_ft) x + (w_att b_ft + b_att)
    watt_eff = w_att @ w_ft                                 # [1, C]
    batt_eff = w_att @ b_ft + b_att                         # [1, 1]

    eye_g = jnp.eye(G, dtype=f32)
    # Attention: block-diag over (ref, packed batch); bias in the last column
    # (matched by the ones row appended to the stacked refs in the kernel).
    watt_aug = jnp.concatenate(
        [jnp.kron(jnp.eye(M * G, dtype=f32), watt_eff),
         jnp.broadcast_to(batt_eff, (M * G, 1))], axis=1)   # [M*G, M*GC+1]
    # Feature transform: block-diag over packed batch; last G columns apply
    # b_ft to the per-batch gate sums (sum_m g_m).
    wft_aug = jnp.concatenate(
        [jnp.kron(eye_g, w_ft), jnp.kron(eye_g, b_ft)], axis=1)  # [GC, GC+G]
    # 3x3 fusion conv: per-tap block-diag blocks, bias in the last column.
    wfus_aug = jnp.concatenate(
        [jnp.kron(eye_g, w_fus[:, :, kh, kw])
         for kh in range(3) for kw in range(3)]
        + [jnp.tile(b_fus, (G, 1))], axis=1)                # [GC, 9*GC+1]

    kernel = functools.partial(_clm_fused_kernel, H=H, W=W, C=C, G=G, M=M)

    out_p = pl.pallas_call(
        kernel,
        out_shape=jax.ShapeDtypeStruct((Bg, GC, P), jnp.float32),
        grid=(Bg,),
        in_specs=[
            pl.BlockSpec((M, 1, GC, P), lambda g: (0, g, 0, 0)),
            pl.BlockSpec((1, GC, P), lambda g: (g, 0, 0)),
            pl.BlockSpec((M * G, M * GC + 1), lambda g: (0, 0)),
            pl.BlockSpec((GC, GC + G), lambda g: (0, 0)),
            pl.BlockSpec((GC, 9 * GC + 1), lambda g: (0, 0)),
        ],
        out_specs=pl.BlockSpec((1, GC, P), lambda g: (g, 0, 0)),
        compiler_params=pltpu.CompilerParams(
            dimension_semantics=("parallel",),
            vmem_limit_bytes=32 * 1024 * 1024,
        ),
    )(refs_p, y_p, watt_aug, wft_aug, wfus_aug)

    return out_p.reshape(B, C, H, W)


# ----------------------------------------------------------------------------
# Pure-JAX reference (NCHW, mirrors the PyTorch module) for validation.
# ----------------------------------------------------------------------------
def simple_clm_reference(y, y_refs, params):
    hi = lax.Precision.HIGHEST
    ref_t = jnp.einsum("mbchw,dc->mbdhw", y_refs, params["w_ft"], precision=hi) \
        + params["b_ft"][None, None, :, None, None]
    att = jnp.einsum("mbchw,dc->mbdhw", ref_t, params["w_att"], precision=hi) \
        + params["b_att"][None, None, :, None, None]        # [M, B, 1, H, W]
    sm = jax.nn.softmax(att, axis=0)
    ws = jnp.sum(ref_t * jax.nn.sigmoid(att) * sm, axis=0)  # [B, C, H, W]
    x = ws + y
    out = lax.conv_general_dilated(
        x, params["w_fus"], window_strides=(1, 1), padding="SAME",
        dimension_numbers=("NCHW", "OIHW", "NCHW"), precision=hi)
    out = out + params["b_fus"][None, :, None, None]
    return jnp.maximum(out, 0.0)


def init_params(key, C):
    ks = jax.random.split(key, 6)
    s1 = 1.0 / np.sqrt(C)            # fan_in = C for the 1x1 convs
    s3 = 1.0 / np.sqrt(C * 9)        # fan_in = C*3*3 for the 3x3 conv
    return {
        "w_ft": jax.random.uniform(ks[0], (C, C), jnp.float32, -s1, s1),
        "b_ft": jax.random.uniform(ks[1], (C,), jnp.float32, -s1, s1),
        "w_att": jax.random.uniform(ks[2], (1, C), jnp.float32, -s1, s1),
        "b_att": jax.random.uniform(ks[3], (1,), jnp.float32, -s1, s1),
        "w_fus": jax.random.uniform(ks[4], (C, C, 3, 3), jnp.float32, -s3, s3),
        "b_fus": jax.random.uniform(ks[5], (C,), jnp.float32, -s3, s3),
    }


if __name__ == "__main__":
    B, C, H, W, M = 2, 4, 16, 16, 3

    key = jax.random.PRNGKey(0)
    k_p, k_y, k_r = jax.random.split(key, 3)
    params = init_params(k_p, C)
    y = jax.random.normal(k_y, (B, C, H, W), jnp.float32)
    y_refs = jax.random.normal(k_r, (M, B, C, H, W), jnp.float32)

    out = jax.jit(simple_clm_forward)(y, y_refs, params)
    out = jax.block_until_ready(out)

    ref = jax.block_until_ready(simple_clm_reference(y, y_refs, params))
    # f32 MXU passes + Newton-corrected approx reciprocal keep the kernel within
    # ~1e-6 of the f32 reference; 1e-3 gives headroom while catching real bugs.
    np.testing.assert_allclose(np.asarray(out), np.asarray(ref),
                               rtol=1e-3, atol=1e-3)

    print("KERNEL_OK")
</pallas_src>

<mosaic_0001>
module attributes {stable_mosaic.version = 11 : i64} {
  func.func @_clm_fused_kernel(%arg0: i32, %arg1: memref<3x1x8x256xf32, #tpu.memory_space<vmem>>, %arg2: memref<1x8x256xf32, #tpu.memory_space<vmem>>, %arg3: memref<6x25xf32, #tpu.memory_space<vmem>>, %arg4: memref<8x10xf32, #tpu.memory_space<vmem>>, %arg5: memref<8x73xf32, #tpu.memory_space<vmem>>, %arg6: memref<1x8x256xf32, #tpu.memory_space<vmem>>) attributes {dimension_semantics = [#tpu.dimension_semantics<parallel>], iteration_bounds = array<i64: 1>, scalar_prefetch = 0 : i64, scratch_operands = 0 : i64, tpu.core_type = #tpu.core_type<tc>, window_params = [{transform_indices = @transform_0, window_bounds = array<i64: 3, 1, 8, 256>}, {transform_indices = @transform_1, window_bounds = array<i64: 1, 8, 256>}, {pipeline_mode = #tpu.pipeline_mode<synchronous>, transform_indices = @transform_2, window_bounds = array<i64: 6, 25>}, {pipeline_mode = #tpu.pipeline_mode<synchronous>, transform_indices = @transform_3, window_bounds = array<i64: 8, 10>}, {pipeline_mode = #tpu.pipeline_mode<synchronous>, transform_indices = @transform_4, window_bounds = array<i64: 8, 73>}, {transform_indices = @transform_5, window_bounds = array<i64: 1, 8, 256>}]} {
    %cst = arith.constant 1.000000e+00 : f32
    %0 = vector.broadcast %cst : f32 to vector<1x256xf32>
    %c0 = arith.constant 0 : index
    %c0_0 = arith.constant 0 : index
    %c0_1 = arith.constant 0 : index
    %c0_2 = arith.constant 0 : index
    %1 = vector.load %arg1[%c0, %c0_0, %c0_1, %c0_2] : memref<3x1x8x256xf32, #tpu.memory_space<vmem>>, vector<1x1x8x256xf32>
    %2 = vector.shape_cast %1 : vector<1x1x8x256xf32> to vector<8x256xf32>
    %c1 = arith.constant 1 : index
    %c0_3 = arith.constant 0 : index
    %c0_4 = arith.constant 0 : index
    %c0_5 = arith.constant 0 : index
    %3 = vector.load %arg1[%c1, %c0_3, %c0_4, %c0_5] : memref<3x1x8x256xf32, #tpu.memory_space<vmem>>, vector<1x1x8x256xf32>
    %4 = vector.shape_cast %3 : vector<1x1x8x256xf32> to vector<8x256xf32>
    %c2 = arith.constant 2 : index
    %c0_6 = arith.constant 0 : index
    %c0_7 = arith.constant 0 : index
    %c0_8 = arith.constant 0 : index
    %5 = vector.load %arg1[%c2, %c0_6, %c0_7, %c0_8] : memref<3x1x8x256xf32, #tpu.memory_space<vmem>>, vector<1x1x8x256xf32>
    %6 = vector.shape_cast %5 : vector<1x1x8x256xf32> to vector<8x256xf32>
    %7 = tpu.concatenate %2, %4, %6, %0 in 0 : vector<8x256xf32>, vector<8x256xf32>, vector<8x256xf32>, vector<1x256xf32> -> vector<25x256xf32>
    %c0_9 = arith.constant 0 : index
    %c0_10 = arith.constant 0 : index
    %8 = vector.load %arg3[%c0_9, %c0_10] : memref<6x25xf32, #tpu.memory_space<vmem>>, vector<6x25xf32>
    %cst_11 = arith.constant dense<0.000000e+00> : vector<6x256xf32>
    %9 = tpu.matmul %8, %7, %cst_11 {dimension_numbers = #tpu.dot_dimension_numbers<[1], [0], [0], [1], [0, 0, 1, 1], [], []>} : vector<6x25xf32>, vector<25x256xf32>, vector<6x256xf32> -> vector<6x256xf32>
    %10 = vector.extract_strided_slice %9 {offsets = [0, 0], sizes = [2, 256], strides = [1, 1]} : vector<6x256xf32> to vector<2x256xf32>
    %11 = vector.extract_strided_slice %9 {offsets = [2, 0], sizes = [2, 256], strides = [1, 1]} : vector<6x256xf32> to vector<2x256xf32>
    %12 = arith.maximumf %10, %11 : vector<2x256xf32>
    %13 = vector.extract_strided_slice %9 {offsets = [4, 0], sizes = [2, 256], strides = [1, 1]} : vector<6x256xf32> to vector<2x256xf32>
    %14 = arith.maximumf %12, %13 : vector<2x256xf32>
    %15 = tpu.concatenate %14, %14, %14 in 0 : vector<2x256xf32>, vector<2x256xf32>, vector<2x256xf32> -> vector<6x256xf32>
    %16 = arith.subf %9, %15 : vector<6x256xf32>
    %17 = math.exp %16 : vector<6x256xf32>
    %18 = vector.extract_strided_slice %17 {offsets = [0, 0], sizes = [2, 256], strides = [1, 1]} : vector<6x256xf32> to vector<2x256xf32>
    %19 = vector.extract_strided_slice %17 {offsets = [2, 0], sizes = [2, 256], strides = [1, 1]} : vector<6x256xf32> to vector<2x256xf32>
    %20 = arith.addf %18, %19 : vector<2x256xf32>
    %21 = vector.extract_strided_slice %17 {offsets = [4, 0], sizes = [2, 256], strides = [1, 1]} : vector<6x256xf32> to vector<2x256xf32>
    %22 = arith.addf %20, %21 : vector<2x256xf32>
    %23 = tpu.reciprocal %22 {approx = true} : vector<2x256xf32> -> vector<2x256xf32>
    %24 = arith.mulf %22, %23 : vector<2x256xf32>
    %cst_12 = arith.constant 2.000000e+00 : f32
    %25 = vector.broadcast %cst_12 : f32 to vector<2x256xf32>
    %26 = arith.subf %25, %24 : vector<2x256xf32>
    %27 = arith.mulf %23, %26 : vector<2x256xf32>
    %28 = arith.negf %9 : vector<6x256xf32>
    %29 = math.exp %28 : vector<6x256xf32>
    %cst_13 = arith.constant 1.000000e+00 : f32
    %30 = vector.broadcast %cst_13 : f32 to vector<6x256xf32>
    %31 = arith.addf %30, %29 : vector<6x256xf32>
    %32 = arith.divf %30, %31 : vector<6x256xf32>
    %33 = arith.mulf %32, %17 : vector<6x256xf32>
    %34 = vector.extract_strided_slice %27 {offsets = [0, 0], sizes = [1, 256], strides = [1, 1]} : vector<2x256xf32> to vector<1x256xf32>
    %35 = vector.extract_strided_slice %33 {offsets = [0, 0], sizes = [1, 256], strides = [1, 1]} : vector<6x256xf32> to vector<1x256xf32>
    %36 = arith.mulf %35, %34 : vector<1x256xf32>
    %37 = vector.extract_strided_slice %2 {offsets = [0, 0], sizes = [4, 256], strides = [1, 1]} : vector<8x256xf32> to vector<4x256xf32>
    %38 = vector.broadcast %36 : vector<1x256xf32> to vector<4x256xf32>
    %39 = arith.mulf %37, %38 : vector<4x256xf32>
    %40 = vector.extract_strided_slice %33 {offsets = [2, 0], sizes = [1, 256], strides = [1, 1]} : vector<6x256xf32> to vector<1x256xf32>
    %41 = arith.mulf %40, %34 : vector<1x256xf32>
    %42 = vector.extract_strided_slice %4 {offsets = [0, 0], sizes = [4, 256], strides = [1, 1]} : vector<8x256xf32> to vector<4x256xf32>
    %43 = vector.broadcast %41 : vector<1x256xf32> to vector<4x256xf32>
    %44 = arith.mulf %42, %43 : vector<4x256xf32>
    %45 = arith.addf %39, %44 : vector<4x256xf32>
    %46 = arith.addf %36, %41 : vector<1x256xf32>
    %47 = vector.extract_strided_slice %33 {offsets = [4, 0], sizes = [1, 256], strides = [1, 1]} : vector<6x256xf32> to vector<1x256xf32>
    %48 = arith.mulf %47, %34 : vector<1x256xf32>
    %49 = vector.extract_strided_slice %6 {offsets = [0, 0], sizes = [4, 256], strides = [1, 1]} : vector<8x256xf32> to vector<4x256xf32>
    %50 = vector.broadcast %48 : vector<1x256xf32> to vector<4x256xf32>
    %51 = arith.mulf %49, %50 : vector<4x256xf32>
    %52 = arith.addf %45, %51 : vector<4x256xf32>
    %53 = arith.addf %46, %48 : vector<1x256xf32>
    %54 = vector.extract_strided_slice %27 {offsets = [1, 0], sizes = [1, 256], strides = [1, 1]} : vector<2x256xf32> to vector<1x256xf32>
    %55 = vector.extract_strided_slice %33 {offsets = [1, 0], sizes = [1, 256], strides = [1, 1]} : vector<6x256xf32> to vector<1x256xf32>
    %56 = arith.mulf %55, %54 : vector<1x256xf32>
    %57 = vector.extract_strided_slice %2 {offsets = [4, 0], sizes = [4, 256], strides = [1, 1]} : vector<8x256xf32> to vector<4x256xf32>
    %58 = vector.broadcast %56 : vector<1x256xf32> to vector<4x256xf32>
    %59 = arith.mulf %57, %58 : vector<4x256xf32>
    %60 = vector.extract_strided_slice %33 {offsets = [3, 0], sizes = [1, 256], strides = [1, 1]} : vector<6x256xf32> to vector<1x256xf32>
    %61 = arith.mulf %60, %54 : vector<1x256xf32>
    %62 = vector.extract_strided_slice %4 {offsets = [4, 0], sizes = [4, 256], strides = [1, 1]} : vector<8x256xf32> to vector<4x256xf32>
    %63 = vector.broadcast %61 : vector<1x256xf32> to vector<4x256xf32>
    %64 = arith.mulf %62, %63 : vector<4x256xf32>
    %65 = arith.addf %59, %64 : vector<4x256xf32>
    %66 = arith.addf %56, %61 : vector<1x256xf32>
    %67 = vector.extract_strided_slice %33 {offsets = [5, 0], sizes = [1, 256], strides = [1, 1]} : vector<6x256xf32> to vector<1x256xf32>
    %68 = arith.mulf %67, %54 : vector<1x256xf32>
    %69 = vector.extract_strided_slice %6 {offsets = [4, 0], sizes = [4, 256], strides = [1, 1]} : vector<8x256xf32> to vector<4x256xf32>
    %70 = vector.broadcast %68 : vector<1x256xf32> to vector<4x256xf32>
    %71 = arith.mulf %69, %70 : vector<4x256xf32>
    %72 = arith.addf %65, %71 : vector<4x256xf32>
    %73 = arith.addf %66, %68 : vector<1x256xf32>
    %74 = tpu.concatenate %52, %72, %53, %73 in 0 : vector<4x256xf32>, vector<4x256xf32>, vector<1x256xf32>, vector<1x256xf32> -> vector<10x256xf32>
    %c0_14 = arith.constant 0 : index
    %c0_15 = arith.constant 0 : index
    %c0_16 = arith.constant 0 : index
    %75 = vector.load %arg2[%c0_14, %c0_15, %c0_16] : memref<1x8x256xf32, #tpu.memory_space<vmem>>, vector<1x8x256xf32>
    %76 = vector.shape_cast %75 : vector<1x8x256xf32> to vector<8x256xf32>
    %c0_17 = arith.constant 0 : index
    %c0_18 = arith.constant 0 : index
    %77 = vector.load %arg4[%c0_17, %c0_18] : memref<8x10xf32, #tpu.memory_space<vmem>>, vector<8x10xf32>
    %cst_19 = arith.constant dense<0.000000e+00> : vector<8x256xf32>
    %78 = tpu.matmul %77, %74, %cst_19 {dimension_numbers = #tpu.dot_dimension_numbers<[1], [0], [0], [1], [0, 0, 1, 1], [], []>} : vector<8x10xf32>, vector<10x256xf32>, vector<8x256xf32> -> vector<8x256xf32>
    %79 = arith.addf %76, %78 : vector<8x256xf32>
    %80 = tpu.iota {dimensions = array<i32: 1>} : vector<8x256xi32>
    %c16_i32 = arith.constant 16 : i32
    %c0_i32 = arith.constant 0 : i32
    %81 = arith.cmpi eq, %c16_i32, %c0_i32 : i32
    %c1_i32 = arith.constant 1 : i32
    %82 = arith.select %81, %c1_i32, %c16_i32 : i32
    %83 = vector.broadcast %82 : i32 to vector<8x256xi32>
    %84 = arith.remsi %80, %83 : vector<8x256xi32>
    %c0_i32_20 = arith.constant 0 : i32
    %85 = vector.broadcast %c0_i32_20 : i32 to vector<8x256xi32>
    %86 = arith.cmpi ne, %84, %85 : vector<8x256xi32>
    %c0_i32_21 = arith.constant 0 : i32
    %87 = vector.broadcast %c0_i32_21 : i32 to vector<8x256xi32>
    %88 = arith.cmpi slt, %84, %87 : vector<8x256xi32>
    %c0_i32_22 = arith.constant 0 : i32
    %89 = arith.cmpi slt, %82, %c0_i32_22 : i32
    %90 = vector.broadcast %89 : i1 to vector<8x256xi1>
    %91 = vector.broadcast %90 : vector<8x256xi1> to vector<8x256xi1>
    %92 = arith.xori %88, %91 : vector<8x256xi1>
    %93 = arith.andi %92, %86 : vector<8x256xi1>
    %94 = vector.broadcast %82 : i32 to vector<8x256xi32>
    %95 = arith.addi %84, %94 : vector<8x256xi32>
    %96 = arith.select %93, %95, %84 : vector<8x256xi1>, vector<8x256xi32>
    %c17_i32 = arith.constant 17 : i32
    %97 = tpu.dynamic_rotate %79 by %c17_i32 dim 1 : vector<8x256xf32>, i32 -> vector<8x256xf32>
    %c-17_i32 = arith.constant -17 : i32
    %98 = vector.broadcast %c-17_i32 : i32 to vector<8x256xi32>
    %99 = arith.addi %80, %98 : vector<8x256xi32>
    %c0_i32_23 = arith.constant 0 : i32
    %100 = vector.broadcast %c0_i32_23 : i32 to vector<8x256xi32>
    %101 = arith.cmpi sge, %99, %100 : vector<8x256xi32>
    %c-17_i32_24 = arith.constant -17 : i32
    %102 = vector.broadcast %c-17_i32_24 : i32 to vector<8x256xi32>
    %103 = arith.addi %80, %102 : vector<8x256xi32>
    %c256_i32 = arith.constant 256 : i32
    %104 = vector.broadcast %c256_i32 : i32 to vector<8x256xi32>
    %105 = arith.cmpi slt, %103, %104 : vector<8x256xi32>
    %106 = arith.andi %101, %105 : vector<8x256xi1>
    %c1_i32_25 = arith.constant 1 : i32
    %107 = vector.broadcast %c1_i32_25 : i32 to vector<8x256xi32>
    %108 = arith.cmpi sge, %96, %107 : vector<8x256xi32>
    %109 = arith.andi %106, %108 : vector<8x256xi1>
    %cst_26 = arith.constant 0.000000e+00 : f32
    %110 = vector.broadcast %cst_26 : f32 to vector<8x256xf32>
    %111 = arith.select %109, %97, %110 : vector<8x256xi1>, vector<8x256xf32>
    %c16_i32_27 = arith.constant 16 : i32
    %112 = tpu.dynamic_rotate %79 by %c16_i32_27 dim 1 : vector<8x256xf32>, i32 -> vector<8x256xf32>
    %c-16_i32 = arith.constant -16 : i32
    %113 = vector.broadcast %c-16_i32 : i32 to vector<8x256xi32>
    %114 = arith.addi %80, %113 : vector<8x256xi32>
    %c0_i32_28 = arith.constant 0 : i32
    %115 = vector.broadcast %c0_i32_28 : i32 to vector<8x256xi32>
    %116 = arith.cmpi sge, %114, %115 : vector<8x256xi32>
    %c-16_i32_29 = arith.constant -16 : i32
    %117 = vector.broadcast %c-16_i32_29 : i32 to vector<8x256xi32>
    %118 = arith.addi %80, %117 : vector<8x256xi32>
    %c256_i32_30 = arith.constant 256 : i32
    %119 = vector.broadcast %c256_i32_30 : i32 to vector<8x256xi32>
    %120 = arith.cmpi slt, %118, %119 : vector<8x256xi32>
    %121 = arith.andi %116, %120 : vector<8x256xi1>
    %cst_31 = arith.constant 0.000000e+00 : f32
    %122 = vector.broadcast %cst_31 : f32 to vector<8x256xf32>
    %123 = arith.select %121, %112, %122 : vector<8x256xi1>, vector<8x256xf32>
    %c15_i32 = arith.constant 15 : i32
    %124 = tpu.dynamic_rotate %79 by %c15_i32 dim 1 : vector<8x256xf32>, i32 -> vector<8x256xf32>
    %c-15_i32 = arith.constant -15 : i32
    %125 = vector.broadcast %c-15_i32 : i32 to vector<8x256xi32>
    %126 = arith.addi %80, %125 : vector<8x256xi32>
    %c0_i32_32 = arith.constant 0 : i32
    %127 = vector.broadcast %c0_i32_32 : i32 to vector<8x256xi32>
    %128 = arith.cmpi sge, %126, %127 : vector<8x256xi32>
    %c-15_i32_33 = arith.constant -15 : i32
    %129 = vector.broadcast %c-15_i32_33 : i32 to vector<8x256xi32>
    %130 = arith.addi %80, %129 : vector<8x256xi32>
    %c256_i32_34 = arith.constant 256 : i32
    %131 = vector.broadcast %c256_i32_34 : i32 to vector<8x256xi32>
    %132 = arith.cmpi slt, %130, %131 : vector<8x256xi32>
    %133 = arith.andi %128, %132 : vector<8x256xi1>
    %c14_i32 = arith.constant 14 : i32
    %134 = vector.broadcast %c14_i32 : i32 to vector<8x256xi32>
    %135 = arith.cmpi sle, %96, %134 : vector<8x256xi32>
    %136 = arith.andi %133, %135 : vector<8x256xi1>
    %cst_35 = arith.constant 0.000000e+00 : f32
    %137 = vector.broadcast %cst_35 : f32 to vector<8x256xf32>
    %138 = arith.select %136, %124, %137 : vector<8x256xi1>, vector<8x256xf32>
    %c1_i32_36 = arith.constant 1 : i32
    %139 = tpu.dynamic_rotate %79 by %c1_i32_36 dim 1 : vector<8x256xf32>, i32 -> vector<8x256xf32>
    %c-1_i32 = arith.constant -1 : i32
    %140 = vector.broadcast %c-1_i32 : i32 to vector<8x256xi32>
    %141 = arith.addi %80, %140 : vector<8x256xi32>
    %c0_i32_37 = arith.constant 0 : i32
    %142 = vector.broadcast %c0_i32_37 : i32 to vector<8x256xi32>
    %143 = arith.cmpi sge, %141, %142 : vector<8x256xi32>
    %c-1_i32_38 = arith.constant -1 : i32
    %144 = vector.broadcast %c-1_i32_38 : i32 to vector<8x256xi32>
    %145 = arith.addi %80, %144 : vector<8x256xi32>
    %c256_i32_39 = arith.constant 256 : i32
    %146 = vector.broadcast %c256_i32_39 : i32 to vector<8x256xi32>
    %147 = arith.cmpi slt, %145, %146 : vector<8x256xi32>
    %148 = arith.andi %143, %147 : vector<8x256xi1>
    %c1_i32_40 = arith.constant 1 : i32
    %149 = vector.broadcast %c1_i32_40 : i32 to vector<8x256xi32>
    %150 = arith.cmpi sge, %96, %149 : vector<8x256xi32>
    %151 = arith.andi %148, %150 : vector<8x256xi1>
    %cst_41 = arith.constant 0.000000e+00 : f32
    %152 = vector.broadcast %cst_41 : f32 to vector<8x256xf32>
    %153 = arith.select %151, %139, %152 : vector<8x256xi1>, vector<8x256xf32>
    %c255_i32 = arith.constant 255 : i32
    %154 = tpu.dynamic_rotate %79 by %c255_i32 dim 1 : vector<8x256xf32>, i32 -> vector<8x256xf32>
    %c1_i32_42 = arith.constant 1 : i32
    %155 = vector.broadcast %c1_i32_42 : i32 to vector<8x256xi32>
    %156 = arith.addi %80, %155 : vector<8x256xi32>
    %c0_i32_43 = arith.constant 0 : i32
    %157 = vector.broadcast %c0_i32_43 : i32 to vector<8x256xi32>
    %158 = arith.cmpi sge, %156, %157 : vector<8x256xi32>
    %c1_i32_44 = arith.constant 1 : i32
    %159 = vector.broadcast %c1_i32_44 : i32 to vector<8x256xi32>
    %160 = arith.addi %80, %159 : vector<8x256xi32>
    %c256_i32_45 = arith.constant 256 : i32
    %161 = vector.broadcast %c256_i32_45 : i32 to vector<8x256xi32>
    %162 = arith.cmpi slt, %160, %161 : vector<8x256xi32>
    %163 = arith.andi %158, %162 : vector<8x256xi1>
    %c14_i32_46 = arith.constant 14 : i32
    %164 = vector.broadcast %c14_i32_46 : i32 to vector<8x256xi32>
    %165 = arith.cmpi sle, %96, %164 : vector<8x256xi32>
    %166 = arith.andi %163, %165 : vector<8x256xi1>
    %cst_47 = arith.constant 0.000000e+00 : f32
    %167 = vector.broadcast %cst_47 : f32 to vector<8x256xf32>
    %168 = arith.select %166, %154, %167 : vector<8x256xi1>, vector<8x256xf32>
    %c241_i32 = arith.constant 241 : i32
    %169 = tpu.dynamic_rotate %79 by %c241_i32 dim 1 : vector<8x256xf32>, i32 -> vector<8x256xf32>
    %c15_i32_48 = arith.constant 15 : i32
    %170 = vector.broadcast %c15_i32_48 : i32 to vector<8x256xi32>
    %171 = arith.addi %80, %170 : vector<8x256xi32>
    %c0_i32_49 = arith.constant 0 : i32
    %172 = vector.broadcast %c0_i32_49 : i32 to vector<8x256xi32>
    %173 = arith.cmpi sge, %171, %172 : vector<8x256xi32>
    %c15_i32_50 = arith.constant 15 : i32
    %174 = vector.broadcast %c15_i32_50 : i32 to vector<8x256xi32>
    %175 = arith.addi %80, %174 : vector<8x256xi32>
    %c256_i32_51 = arith.constant 256 : i32
    %176 = vector.broadcast %c256_i32_51 : i32 to vector<8x256xi32>
    %177 = arith.cmpi slt, %175, %176 : vector<8x256xi32>
    %178 = arith.andi %173, %177 : vector<8x256xi1>
    %c1_i32_52 = arith.constant 1 : i32
    %179 = vector.broadcast %c1_i32_52 : i32 to vector<8x256xi32>
    %180 = arith.cmpi sge, %96, %179 : vector<8x256xi32>
    %181 = arith.andi %178, %180 : vector<8x256xi1>
    %cst_53 = arith.constant 0.000000e+00 : f32
    %182 = vector.broadcast %cst_53 : f32 to vector<8x256xf32>
    %183 = arith.select %181, %169, %182 : vector<8x256xi1>, vector<8x256xf32>
    %c240_i32 = arith.constant 240 : i32
    %184 = tpu.dynamic_rotate %79 by %c240_i32 dim 1 : vector<8x256xf32>, i32 -> vector<8x256xf32>
    %c16_i32_54 = arith.constant 16 : i32
    %185 = vector.broadcast %c16_i32_54 : i32 to vector<8x256xi32>
    %186 = arith.addi %80, %185 : vector<8x256xi32>
    %c0_i32_55 = arith.constant 0 : i32
    %187 = vector.broadcast %c0_i32_55 : i32 to vector<8x256xi32>
    %188 = arith.cmpi sge, %186, %187 : vector<8x256xi32>
    %c16_i32_56 = arith.constant 16 : i32
    %189 = vector.broadcast %c16_i32_56 : i32 to vector<8x256xi32>
    %190 = arith.addi %80, %189 : vector<8x256xi32>
    %c256_i32_57 = arith.constant 256 : i32
    %191 = vector.broadcast %c256_i32_57 : i32 to vector<8x256xi32>
    %192 = arith.cmpi slt, %190, %191 : vector<8x256xi32>
    %193 = arith.andi %188, %192 : vector<8x256xi1>
    %cst_58 = arith.constant 0.000000e+00 : f32
    %194 = vector.broadcast %cst_58 : f32 to vector<8x256xf32>
    %195 = arith.select %193, %184, %194 : vector<8x256xi1>, vector<8x256xf32>
    %c239_i32 = arith.constant 239 : i32
    %196 = tpu.dynamic_rotate %79 by %c239_i32 dim 1 : vector<8x256xf32>, i32 -> vector<8x256xf32>
    %c17_i32_59 = arith.constant 17 : i32
    %197 = vector.broadcast %c17_i32_59 : i32 to vector<8x256xi32>
    %198 = arith.addi %80, %197 : vector<8x256xi32>
    %c0_i32_60 = arith.constant 0 : i32
    %199 = vector.broadcast %c0_i32_60 : i32 to vector<8x256xi32>
    %200 = arith.cmpi sge, %198, %199 : vector<8x256xi32>
    %c17_i32_61 = arith.constant 17 : i32
    %201 = vector.broadcast %c17_i32_61 : i32 to vector<8x256xi32>
    %202 = arith.addi %80, %201 : vector<8x256xi32>
    %c256_i32_62 = arith.constant 256 : i32
    %203 = vector.broadcast %c256_i32_62 : i32 to vector<8x256xi32>
    %204 = arith.cmpi slt, %202, %203 : vector<8x256xi32>
    %205 = arith.andi %200, %204 : vector<8x256xi1>
    %c14_i32_63 = arith.constant 14 : i32
    %206 = vector.broadcast %c14_i32_63 : i32 to vector<8x256xi32>
    %207 = arith.cmpi sle, %96, %206 : vector<8x256xi32>
    %208 = arith.andi %205, %207 : vector<8x256xi1>
    %cst_64 = arith.constant 0.000000e+00 : f32
    %209 = vector.broadcast %cst_64 : f32 to vector<8x256xf32>
    %210 = arith.select %208, %196, %209 : vector<8x256xi1>, vector<8x256xf32>
    %211 = tpu.concatenate %111, %123, %138, %153, %79, %168, %183, %195, %210, %0 in 0 : vector<8x256xf32>, vector<8x256xf32>, vector<8x256xf32>, vector<8x256xf32>, vector<8x256xf32>, vector<8x256xf32>, vector<8x256xf32>, vector<8x256xf32>, vector<8x256xf32>, vector<1x256xf32> -> vector<73x256xf32>
    %c0_65 = arith.constant 0 : index
    %c0_66 = arith.constant 0 : index
    %212 = vector.load %arg5[%c0_65, %c0_66] : memref<8x73xf32, #tpu.memory_space<vmem>>, vector<8x73xf32>
    %cst_67 = arith.constant dense<0.000000e+00> : vector<8x256xf32>
    %213 = tpu.matmul %212, %211, %cst_67 {dimension_numbers = #tpu.dot_dimension_numbers<[1], [0], [0], [1], [0, 0, 1, 1], [], []>} : vector<8x73xf32>, vector<73x256xf32>, vector<8x256xf32> -> vector<8x256xf32>
    %cst_68 = arith.constant 0.000000e+00 : f32
    %214 = vector.broadcast %cst_68 : f32 to vector<8x256xf32>
    %215 = arith.maximumf %213, %214 : vector<8x256xf32>
    %c0_69 = arith.constant 0 : index
    %c0_70 = arith.constant 0 : index
    %c0_71 = arith.constant 0 : index
    %216 = vector.load %arg6[%c0_69, %c0_70, %c0_71] : memref<1x8x256xf32, #tpu.memory_space<vmem>>, vector<1x8x256xf32>
    %217 = vector.shape_cast %216 : vector<1x8x256xf32> to vector<8x256xf32>
    %218 = vector.shape_cast %215 : vector<8x256xf32> to vector<1x8x256xf32>
    tpu.vector_store %arg6[%c0_69, %c0_70, %c0_71], %218 {strides = array<i32>} : memref<1x8x256xf32, #tpu.memory_space<vmem>>, vector<1x8x256xf32>,
    return
  }
  func.func @transform_0(%arg0: i32) -> (i32, i32, i32, i32) {
    %c0_i32 = arith.constant 0 : i32
    %c0_i32_0 = arith.constant 0 : i32
    %c0_i32_1 = arith.constant 0 : i32
    %c0_i32_2 = arith.constant 0 : i32
    return %c0_i32, %arg0, %c0_i32_0, %c0_i32_1 : i32, i32, i32, i32
  }
  func.func @transform_1(%arg0: i32) -> (i32, i32, i32) {
    %c0_i32 = arith.constant 0 : i32
    %c0_i32_0 = arith.constant 0 : i32
    %c0_i32_1 = arith.constant 0 : i32
    return %arg0, %c0_i32, %c0_i32_0 : i32, i32, i32
  }
  func.func @transform_2(%arg0: i32) -> (i32, i32) {
    %c0_i32 = arith.constant 0 : i32
    %c0_i32_0 = arith.constant 0 : i32
    %c0_i32_1 = arith.constant 0 : i32
    return %c0_i32, %c0_i32_0 : i32, i32
  }
  func.func @transform_3(%arg0: i32) -> (i32, i32) {
    %c0_i32 = arith.constant 0 : i32
    %c0_i32_0 = arith.constant 0 : i32
    %c0_i32_1 = arith.constant 0 : i32
    return %c0_i32, %c0_i32_0 : i32, i32
  }
  func.func @transform_4(%arg0: i32) -> (i32, i32) {
    %c0_i32 = arith.constant 0 : i32
    %c0_i32_0 = arith.constant 0 : i32
    %c0_i32_1 = arith.constant 0 : i32
    return %c0_i32, %c0_i32_0 : i32, i32
  }
  func.func @transform_5(%arg0: i32) -> (i32, i32, i32) {
    %c0_i32 = arith.constant 0 : i32
    %c0_i32_0 = arith.constant 0 : i32
    %c0_i32_1 = arith.constant 0 : i32
    return %arg0, %c0_i32, %c0_i32_0 : i32, i32, i32
  }
}

</mosaic_0001>

<llo_original>
// kernel: simple_clm_forward.1
$region0: #{simple_clm_forward.1}
  #allocation0 [shape = 'u32[]', space=smem, size = 0x4, offset = 0x4, fixed_abs, tag = 'smem constant byte address 0x4 - core index']
  #allocation1 [shape = 'u32[144,128]{1,0:T(1,128)}', space=vmem, size = 0x12000, scoped, tag = 'internal scratch']
  %s0 = inlined_call_operand.vmem [shape: f32[3,1,8,256], index: 0, kind: input, shape index: {}]
  %s1 = inlined_call_operand.vmem [shape: f32[1,8,256], index: 1, kind: input, shape index: {}]
  %s2 = inlined_call_operand.vmem [shape: f32[6,25], index: 2, kind: input, shape index: {}]
  %s3 = inlined_call_operand.vmem [shape: f32[8,10], index: 3, kind: input, shape index: {}]
  %s4 = inlined_call_operand.vmem [shape: f32[8,73], index: 4, kind: input, shape index: {}]
  %s5 = inlined_call_operand.vmem [shape: f32[1,8,256], index: 5, kind: output, shape index: {}]
  %s6 = sld [smem:[#allocation0]]
  $region30: #{simple_clm_forward.1} parent=0
    _
  %s8 = ssub.s32 1, %s6
  %s9 = scalar_select 0, %s8, %s6
  // Predicated region
  $region2: #{simple_clm_forward.1} parent=0 // pred_check
    _
  $region3: #{simple_clm_forward.1} parent=0 // pred_check_branch
    %11 = sbr.rel (0) target = $region5
  $region4: #{simple_clm_forward.1} parent=0 // pred_region
    _
  $region5: #{simple_clm_forward.1} parent=0 // pred_fallthru
    _
  // Predicated region
  $region6: #{simple_clm_forward.1} parent=0 // pred_check
    _
  $region7: #{simple_clm_forward.1} parent=0 // pred_check_branch
    %13 = sbr.rel (0) target = $region9
  $region8: #{simple_clm_forward.1} parent=0 // pred_region
    _
  $region9: #{simple_clm_forward.1} parent=0 // pred_fallthru
    _
  // Predicated region
  $region10: #{simple_clm_forward.1} parent=0 // pred_check
    _
  $region11: #{simple_clm_forward.1} parent=0 // pred_check_branch
    %15 = sbr.rel (0) target = $region13
  $region12: #{simple_clm_forward.1} parent=0 // pred_region
    _
  $region13: #{simple_clm_forward.1} parent=0 // pred_fallthru
    _
  // Predicated region
  $region14: #{simple_clm_forward.1} parent=0 // pred_check
    _
  $region15: #{simple_clm_forward.1} parent=0 // pred_check_branch
    %17 = sbr.rel (0) target = $region17
  $region16: #{simple_clm_forward.1} parent=0 // pred_region
    _
  $region17: #{simple_clm_forward.1} parent=0 // pred_fallthru
    _
  // Predicated region
  $region18: #{simple_clm_forward.1} parent=0 // pred_check
    _
  $region19: #{simple_clm_forward.1} parent=0 // pred_check_branch
    %19 = sbr.rel (0) target = $region21
  $region20: #{simple_clm_forward.1} parent=0 // pred_region
    _
  $region21: #{simple_clm_forward.1} parent=0 // pred_fallthru
    _
  %v20 = vld [vmem:[%s0] sm:$0xff]
  %v21 = vld [vmem:[%s0 + $0x8] sm:$0xff]
  %s22 = scalar_lea.vmem %s0, 16
  %v23 = vld [vmem:[%s22] sm:$0xff]
  %v24 = vld [vmem:[%s22 + $0x8] sm:$0xff]
  %s25 = scalar_lea.vmem %s0, 32
  %v26 = vld [vmem:[%s25] sm:$0xff]
  %v27 = vld [vmem:[%s25 + $0x8] sm:$0xff]
  %v28 = vld [vmem:[%s2] sm:$0x3f]
  %vm29 = vcmask 203776
  %v31 = vsel %vm29, %v28, 0
  %vm33 = vcmask 1040384
  %v35 = vsel %vm33, 1.0, 0
  %37 = vmatprep.subr.mxu0 0.0
  %38 = vmatpush1.msra.mxu0 0.0
  %39 = vmatprep.subr.mxu0 0.0
  %40 = vmatpush1.msra.mxu0 0.0
  %41 = vmatprep.subr.mxu0 0.0
  %42 = vmatpush1.msra.mxu0 0.0
  %43 = vmatprep.subr.mxu0 0.0
  %44 = vmatpush1.msra.mxu0 0.0
  %45 = vmatprep.subr.mxu0 0.0
  %46 = vmatpush1.msra.mxu0 0.0
  %47 = vmatprep.subr.mxu0 0.0
  %48 = vmatpush1.msra.mxu0 0.0
  %49 = vmatprep.subr.mxu0 0.0
  %50 = vmatpush1.msra.mxu0 0.0
  %51 = vmatprep.subr.mxu0 0.0
  %52 = vmatpush1.msra.mxu0 0.0
  %53 = vmatprep.subr.mxu0 0.0
  %54 = vmatpush1.msra.mxu0 0.0
  %55 = vmatprep.subr.mxu0 0.0
  %56 = vmatpush1.msra.mxu0 0.0
  %57 = vmatprep.subr.mxu0 0.0
  %58 = vmatpush1.msra.mxu0 0.0
  %59 = vmatprep.subr.mxu0 0.0
  %60 = vmatpush1.msra.mxu0 0.0
  %61 = vmatprep.subr.mxu0 %v35
  %62 = vmatpush1.msra.mxu0 %v35
  %63 = vmatprep.subr.mxu0 %v27
  %64 = vmatpush1.msra.mxu0 %v26
  %65 = vmatprep.subr.mxu0 %v24
  %66 = vmatpush1.msra.mxu0 %v23
  %67 = vmatprep.subr.mxu0 %v21
  %68 = vmatpush1.msra.mxu0 %v20
  %69 = vmatprep.subr.mxu0 0.0
  %70 = vmatpush2.msra.mxu0 0.0
  %71 = vmatprep.subr.mxu0 0.0
  %72 = vmatpush2.msra.mxu0 0.0
  %73 = vmatprep.subr.mxu0 0.0
  %74 = vmatpush2.msra.mxu0 0.0
  %75 = vmatprep.subr.mxu0 0.0
  %76 = vmatpush2.msra.mxu0 0.0
  %77 = vmatprep.subr.mxu0 0.0
  %78 = vmatpush2.msra.mxu0 0.0
  %79 = vmatprep.subr.mxu0 0.0
  %80 = vmatpush2.msra.mxu0 0.0
  %81 = vmatprep.subr.mxu0 0.0
  %82 = vmatpush2.msra.mxu0 0.0
  %83 = vmatprep.subr.mxu0 0.0
  %84 = vmatpush2.msra.mxu0 0.0
  %85 = vmatprep.subr.mxu0 0.0
  %86 = vmatpush2.msra.mxu0 0.0
  %87 = vmatprep.subr.mxu0 0.0
  %88 = vmatpush2.msra.mxu0 0.0
  %89 = vmatprep.subr.mxu0 0.0
  %90 = vmatpush2.msra.mxu0 0.0
  %91 = vmatprep.subr.mxu0 0.0
  %92 = vmatpush2.msra.mxu0 0.0
  %93 = vmatprep.subr.mxu0 0.0
  %94 = vmatpush2.msra.mxu0 0.0
  %95 = vmatprep.subr.mxu0 0.0
  %96 = vmatpush2.msra.mxu0 0.0
  %97 = vmatprep.subr.mxu0 0.0
  %98 = vmatpush2.msra.mxu0 0.0
  %99 = vmatprep.subr.mxu0 0.0
  %100 = vmatpush2.msra.mxu0 0.0
  %101 = vmatprep.mubr.f32.mxu0 0.0
  %102 = vmatmul.mubr.f32.gmra.mxu0 %v31
  %v103 = vpop.f32.mrf.mxu0
  %v104 = vadd.f32 0.0, %v103
  %v105 = vpop.f32.mrf.mxu0
  %v106 = vadd.f32 0.0, %v105
  %107 = vdwg.mxu0
  %v110 = vrot.slane %v104, 2
  %v111 = vrot.slane %v106, 2
  %v114 = vmax.f32 %v104, %v110
  %v115 = vmax.f32 %v106, %v111
  %v116 = vrot.slane %v104, 4
  %v117 = vrot.slane %v106, 4
  %v120 = vmax.f32 %v114, %v116
  %v121 = vmax.f32 %v115, %v117
  %v124 = vrot.slane %v120, 6
  %v125 = vrot.slane %v121, 6
  %v128 = vrot.slane %v120, 4
  %v129 = vrot.slane %v121, 4
  %vm132 = vcmask 1041408
  %v133 = vsel %vm132, %v120, %v124
  %v134 = vsel %vm132, %v121, %v125
  %vm135 = vcmask 1043456
  %v136 = vsel %vm135, %v133, %v128
  %v137 = vsel %vm135, %v134, %v129
  %v138 = vsub.f32 %v104, %v136
  %v139 = vsub.f32 %v106, %v137
  %v140 = vmul.f32 %v138, 1.442695
  %v141 = vpow.pop %v140
  %v142 = vmul.f32 %v139, 1.442695
  %v143 = vpow.pop %v142
  %v146 = vrot.slane %v141, 2
  %v147 = vrot.slane %v143, 2
  %v150 = vadd.f32 %v141, %v146
  %v151 = vadd.f32 %v143, %v147
  %v152 = vrot.slane %v141, 4
  %v153 = vrot.slane %v143, 4
  %v156 = vadd.f32 %v150, %v152
  %v157 = vadd.f32 %v151, %v153
  %v158 = vrcp.pop %v156
  %v159 = vrcp.pop %v157
  %v160 = vmul.f32 %v156, %v158
  %v161 = vmul.f32 %v157, %v159
  %v162 = vsub.f32 2.0, %v160
  %v163 = vsub.f32 2.0, %v161
  %v164 = vmul.f32 %v158, %v162
  %v165 = vmul.f32 %v159, %v163
  %v166 = vxor.u32 %v104, 2147483648
  %v167 = vxor.u32 %v106, 2147483648
  %v168 = vmul.f32 %v166, 1.442695
  %v169 = vpow.pop %v168
  %v170 = vmul.f32 %v167, 1.442695
  %v171 = vpow.pop %v170
  %v172 = vadd.f32 %v169, 1.0
  %v173 = vadd.f32 %v171, 1.0
  %v174 = vrcp.pop %v172
  %v175 = vmul.f32 1.0, %v174
  %v176 = vrcp.pop %v173
  %v177 = vmul.f32 1.0, %v176
  %v178 = vmul.f32 %v175, %v141
  %v179 = vmul.f32 %v177, %v143
  %v180 = vmul.f32 %v178, %v164
  %v181 = vmul.f32 %v179, %v165
  %v182 = vlaneseq
  %v183 = vshrl.u32 %v182, 7
  %v184 = vsub.s32 0, %v183
  %v185 = vrot.slane %v180, %v184
  %v186 = vlaneseq
  %v187 = vshrl.u32 %v186, 7
  %v188 = vsub.s32 0, %v187
  %v189 = vrot.slane %v181, %v188
  %v190 = vmul.f32 %v20, %v185
  %v191 = vmul.f32 %v21, %v189
  %v194 = vrot.slane %v164, 6
  %v195 = vrot.slane %v165, 6
  %v198 = vmul.f32 %v178, %v194
  %v199 = vmul.f32 %v179, %v195
  %v200 = vlaneseq
  %v201 = vshrl.u32 %v200, 7
  %v202 = vsub.s32 2, %v201
  %v203 = vrot.slane %v198, %v202
  %v204 = vlaneseq
  %v205 = vshrl.u32 %v204, 7
  %v206 = vsub.s32 2, %v205
  %v207 = vrot.slane %v199, %v206
  %v208 = vmul.f32 %v23, %v203
  %v209 = vmul.f32 %v24, %v207
  %v210 = vadd.f32 %v190, %v208
  %v211 = vadd.f32 %v191, %v209
  %v214 = vrot.slane %v198, 2
  %v215 = vrot.slane %v199, 2
  %v218 = vadd.f32 %v180, %v214
  %v219 = vadd.f32 %v181, %v215
  %v220 = vrot.slane %v164, 4
  %v221 = vrot.slane %v165, 4
  %v224 = vmul.f32 %v178, %v220
  %v225 = vmul.f32 %v179, %v221
  %v226 = vlaneseq
  %v227 = vshrl.u32 %v226, 7
  %v228 = vsub.s32 4, %v227
  %v229 = vrot.slane %v224, %v228
  %v230 = vlaneseq
  %v231 = vshrl.u32 %v230, 7
  %v232 = vsub.s32 4, %v231
  %v233 = vrot.slane %v225, %v232
  %v234 = vmul.f32 %v26, %v229
  %v235 = vmul.f32 %v27, %v233
  %v236 = vadd.f32 %v210, %v234
  %v237 = vadd.f32 %v211, %v235
  %v240 = vrot.slane %v224, 4
  %v241 = vrot.slane %v225, 4
  %v244 = vadd.f32 %v218, %v240
  %v245 = vadd.f32 %v219, %v241
  %v246 = vlaneseq
  %v247 = vshrl.u32 %v246, 7
  %v248 = vsub.s32 1, %v247
  %v249 = vrot.slane %v180, %v248
  %v250 = vlaneseq
  %v251 = vshrl.u32 %v250, 7
  %v252 = vsub.s32 1, %v251
  %v253 = vrot.slane %v181, %v252
  %v254 = vmul.f32 %v20, %v249
  %v255 = vmul.f32 %v21, %v253
  %v256 = vlaneseq
  %v257 = vshrl.u32 %v256, 7
  %v258 = vsub.s32 3, %v257
  %v259 = vrot.slane %v198, %v258
  %v260 = vlaneseq
  %v261 = vshrl.u32 %v260, 7
  %v262 = vsub.s32 3, %v261
  %v263 = vrot.slane %v199, %v262
  %v264 = vmul.f32 %v23, %v259
  %v265 = vmul.f32 %v24, %v263
  %v266 = vadd.f32 %v254, %v264
  %v267 = vadd.f32 %v255, %v265
  %v268 = vlaneseq
  %v269 = vshrl.u32 %v268, 7
  %v270 = vsub.s32 5, %v269
  %v271 = vrot.slane %v224, %v270
  %v272 = vlaneseq
  %v273 = vshrl.u32 %v272, 7
  %v274 = vsub.s32 5, %v273
  %v275 = vrot.slane %v225, %v274
  %v276 = vmul.f32 %v26, %v271
  %v277 = vmul.f32 %v27, %v275
  %v278 = vadd.f32 %v266, %v276
  %v279 = vadd.f32 %v267, %v277
  %v280 = vsel %vm135, %v236, %v278
  %v281 = vsel %vm135, %v237, %v279
  %v282 = vld [vmem:[%s1] sm:$0xff]
  %v283 = vld [vmem:[%s1 + $0x8] sm:$0xff]
  %v284 = vld [vmem:[%s3] sm:$0xff]
  %vm285 = vcmask 80896
  %v287 = vsel %vm285, %v284, 0
  %v290 = vsel %vm132, %v244, 0
  %v293 = vsel %vm132, %v245, 0
  %295 = vmatprep.subr.mxu0 0.0
  %296 = vmatpush1.msra.mxu0 0.0
  %297 = vmatprep.subr.mxu0 0.0
  %298 = vmatpush1.msra.mxu0 0.0
  %299 = vmatprep.subr.mxu0 0.0
  %300 = vmatpush1.msra.mxu0 0.0
  %301 = vmatprep.subr.mxu0 0.0
  %302 = vmatpush1.msra.mxu0 0.0
  %303 = vmatprep.subr.mxu0 0.0
  %304 = vmatpush1.msra.mxu0 0.0
  %305 = vmatprep.subr.mxu0 0.0
  %306 = vmatpush1.msra.mxu0 0.0
  %307 = vmatprep.subr.mxu0 0.0
  %308 = vmatpush1.msra.mxu0 0.0
  %309 = vmatprep.subr.mxu0 0.0
  %310 = vmatpush1.msra.mxu0 0.0
  %311 = vmatprep.subr.mxu0 0.0
  %312 = vmatpush1.msra.mxu0 0.0
  %313 = vmatprep.subr.mxu0 0.0
  %314 = vmatpush1.msra.mxu0 0.0
  %315 = vmatprep.subr.mxu0 0.0
  %316 = vmatpush1.msra.mxu0 0.0
  %317 = vmatprep.subr.mxu0 0.0
  %318 = vmatpush1.msra.mxu0 0.0
  %319 = vmatprep.subr.mxu0 0.0
  %320 = vmatpush1.msra.mxu0 0.0
  %321 = vmatprep.subr.mxu0 0.0
  %322 = vmatpush1.msra.mxu0 0.0
  %323 = vmatprep.subr.mxu0 %v293
  %324 = vmatpush1.msra.mxu0 %v290
  %325 = vmatprep.subr.mxu0 %v281
  %326 = vmatpush1.msra.mxu0 %v280
  %327 = vmatprep.subr.mxu0 0.0
  %328 = vmatpush2.msra.mxu0 0.0
  %329 = vmatprep.subr.mxu0 0.0
  %330 = vmatpush2.msra.mxu0 0.0
  %331 = vmatprep.subr.mxu0 0.0
  %332 = vmatpush2.msra.mxu0 0.0
  %333 = vmatprep.subr.mxu0 0.0
  %334 = vmatpush2.msra.mxu0 0.0
  %335 = vmatprep.subr.mxu0 0.0
  %336 = vmatpush2.msra.mxu0 0.0
  %337 = vmatprep.subr.mxu0 0.0
  %338 = vmatpush2.msra.mxu0 0.0
  %339 = vmatprep.subr.mxu0 0.0
  %340 = vmatpush2.msra.mxu0 0.0
  %341 = vmatprep.subr.mxu0 0.0
  %342 = vmatpush2.msra.mxu0 0.0
  %343 = vmatprep.subr.mxu0 0.0
  %344 = vmatpush2.msra.mxu0 0.0
  %345 = vmatprep.subr.mxu0 0.0
  %346 = vmatpush2.msra.mxu0 0.0
  %347 = vmatprep.subr.mxu0 0.0
  %348 = vmatpush2.msra.mxu0 0.0
  %349 = vmatprep.subr.mxu0 0.0
  %350 = vmatpush2.msra.mxu0 0.0
  %351 = vmatprep.subr.mxu0 0.0
  %352 = vmatpush2.msra.mxu0 0.0
  %353 = vmatprep.subr.mxu0 0.0
  %354 = vmatpush2.msra.mxu0 0.0
  %355 = vmatprep.subr.mxu0 0.0
  %356 = vmatpush2.msra.mxu0 0.0
  %357 = vmatprep.subr.mxu0 0.0
  %358 = vmatpush2.msra.mxu0 0.0
  %359 = vmatprep.mubr.f32.mxu0 0.0
  %360 = vmatmul.mubr.f32.gmra.mxu0 %v287
  %v361 = vpop.f32.mrf.mxu0
  %v362 = vadd.f32 0.0, %v361
  %v363 = vpop.f32.mrf.mxu0
  %v364 = vadd.f32 0.0, %v363
  %365 = vdwg.mxu0
  %v366 = vadd.f32 %v282, %v362
  %v367 = vadd.f32 %v283, %v364
  %v368 = vlaneseq
  %v369 = vand.u32 %v368, 127
  %v370 = vadd.s32 %v369, 128
  %vm371 = vcmp.lt.s32.totalorder %v369, 0
  %v372 = vsub.s32 0, %v369
  %v373 = vsel %vm371, %v372, %v369
  %v374 = vshrl.u32 %v373, 4
  %v375 = vand.u32 %v373, 15
  %v376 = vsub.s32 0, %v375
  %v377 = vsel %vm371, %v376, %v375
  %vm378 = vcmp.lt.s32.totalorder %v370, 0
  %v379 = vsub.s32 0, %v370
  %v380 = vsel %vm378, %v379, %v370
  %v381 = vshrl.u32 %v380, 4
  %v382 = vand.u32 %v380, 15
  %v383 = vsub.s32 0, %v382
  %v384 = vsel %vm378, %v383, %v382
  %vm385 = vcmp.ne.s32.totalorder %v377, 0
  %vm386 = vcmp.ne.s32.totalorder %v384, 0
  %vm387 = vcmp.lt.s32.totalorder %v377, 0
  %vm388 = vcmp.lt.s32.totalorder %v384, 0
  %vm389 = vmand %vm387, %vm385
  %vm390 = vmand %vm388, %vm386
  %v391 = vadd.s32 %v377, 16
  %v392 = vadd.s32 %v384, 16
  %v393 = vsel %vm389, %v391, %v377
  %v394 = vsel %vm390, %v392, %v384
  %395 = vrot.lane.b32.xlu0 %v366, 17
  %v396 = vpop.permute.xlu0 %395
  %397 = vrot.lane.b32.xlu0 %v367, 17
  %v398 = vpop.permute.xlu0 %397
  %vm399 = vcmp.lt.s32.totalorder %v369, 17
  %v400 = vsel %vm399, %v396, %v398
  %v401 = vsel %vm399, %v398, %v396
  %v402 = vadd.s32 %v369, 4294967279
  %v403 = vadd.s32 %v370, 4294967279
  %vm404 = vcmp.ge.s32.totalorder %v402, 0
  %vm405 = vcmp.ge.s32.totalorder %v403, 0
  %vm406 = vcmp.lt.s32.totalorder %v402, 256
  %vm407 = vcmp.lt.s32.totalorder %v403, 256
  %vm408 = vmand %vm404, %vm406
  %vm409 = vmand %vm405, %vm407
  %vm410 = vcmp.ge.s32.totalorder %v393, 1
  %vm411 = vcmp.ge.s32.totalorder %v394, 1
  %vm412 = vmand %vm408, %vm410
  %vm413 = vmand %vm409, %vm411
  %v414 = vsel %vm412, %v401, 0.0
  %v415 = vsel %vm413, %v400, 0.0
  %416 = vrot.lane.b32.xlu0 %v366, 16
  %v417 = vpop.permute.xlu0 %416
  %418 = vrot.lane.b32.xlu0 %v367, 16
  %v419 = vpop.permute.xlu0 %418
  %vm420 = vcmp.lt.s32.totalorder %v369, 16
  %v421 = vsel %vm420, %v417, %v419
  %v422 = vsel %vm420, %v419, %v417
  %v423 = vadd.s32 %v369, 4294967280
  %v424 = vadd.s32 %v370, 4294967280
  %vm425 = vcmp.ge.s32.totalorder %v423, 0
  %vm426 = vcmp.ge.s32.totalorder %v424, 0
  %vm427 = vcmp.lt.s32.totalorder %v423, 256
  %vm428 = vcmp.lt.s32.totalorder %v424, 256
  %vm429 = vmand %vm425, %vm427
  %vm430 = vmand %vm426, %vm428
  %v431 = vsel %vm429, %v422, 0.0
  %v432 = vsel %vm430, %v421, 0.0
  %433 = vrot.lane.b32.xlu0 %v366, 15
  %v434 = vpop.permute.xlu0 %433
  %435 = vrot.lane.b32.xlu0 %v367, 15
  %v436 = vpop.permute.xlu0 %435
  %vm437 = vcmp.lt.s32.totalorder %v369, 15
  %v438 = vsel %vm437, %v434, %v436
  %v439 = vsel %vm437, %v436, %v434
  %v440 = vadd.s32 %v369, 4294967281
  %v441 = vadd.s32 %v370, 4294967281
  %vm442 = vcmp.ge.s32.totalorder %v440, 0
  %vm443 = vcmp.ge.s32.totalorder %v441, 0
  %vm444 = vcmp.lt.s32.totalorder %v440, 256
  %vm445 = vcmp.lt.s32.totalorder %v441, 256
  %vm446 = vmand %vm442, %vm444
  %vm447 = vmand %vm443, %vm445
  %vm448 = vcmp.le.s32.totalorder %v393, 14
  %vm449 = vcmp.le.s32.totalorder %v394, 14
  %vm450 = vmand %vm446, %vm448
  %vm451 = vmand %vm447, %vm449
  %v452 = vsel %vm450, %v439, 0.0
  %v453 = vsel %vm451, %v438, 0.0
  %454 = vrot.lane.b32.xlu0 %v366, 1
  %v455 = vpop.permute.xlu0 %454
  %456 = vrot.lane.b32.xlu0 %v367, 1
  %v457 = vpop.permute.xlu0 %456
  %vm458 = vcmp.lt.s32.totalorder %v369, 1
  %v459 = vsel %vm458, %v455, %v457
  %v460 = vsel %vm458, %v457, %v455
  %v461 = vadd.s32 %v369, 4294967295
  %v462 = vadd.s32 %v370, 4294967295
  %vm463 = vcmp.ge.s32.totalorder %v461, 0
  %vm464 = vcmp.ge.s32.totalorder %v462, 0
  %vm465 = vcmp.lt.s32.totalorder %v461, 256
  %vm466 = vcmp.lt.s32.totalorder %v462, 256
  %vm467 = vmand %vm463, %vm465
  %vm468 = vmand %vm464, %vm466
  %vm469 = vmand %vm467, %vm410
  %vm470 = vmand %vm468, %vm411
  %v471 = vsel %vm469, %v460, 0.0
  %v472 = vsel %vm470, %v459, 0.0
  %473 = vrot.lane.b32.xlu0 %v366, 127
  %v474 = vpop.permute.xlu0 %473
  %475 = vrot.lane.b32.xlu0 %v367, 127
  %v476 = vpop.permute.xlu0 %475
  %vm477 = vcmp.lt.s32.totalorder %v369, 127
  %v478 = vsel %vm477, %v474, %v476
  %v479 = vsel %vm477, %v476, %v474
  %v480 = vadd.s32 %v369, 1
  %v481 = vadd.s32 %v370, 1
  %vm482 = vcmp.ge.s32.totalorder %v480, 0
  %vm483 = vcmp.ge.s32.totalorder %v481, 0
  %vm484 = vcmp.lt.s32.totalorder %v480, 256
  %vm485 = vcmp.lt.s32.totalorder %v481, 256
  %vm486 = vmand %vm482, %vm484
  %vm487 = vmand %vm483, %vm485
  %vm488 = vmand %vm486, %vm448
  %vm489 = vmand %vm487, %vm449
  %v490 = vsel %vm488, %v478, 0.0
  %v491 = vsel %vm489, %v479, 0.0
  %492 = vrot.lane.b32.xlu0 %v366, 113
  %v493 = vpop.permute.xlu0 %492
  %494 = vrot.lane.b32.xlu0 %v367, 113
  %v495 = vpop.permute.xlu0 %494
  %vm496 = vcmp.lt.s32.totalorder %v369, 113
  %v497 = vsel %vm496, %v493, %v495
  %v498 = vsel %vm496, %v495, %v493
  %v499 = vadd.s32 %v369, 15
  %v500 = vadd.s32 %v370, 15
  %vm501 = vcmp.ge.s32.totalorder %v499, 0
  %vm502 = vcmp.ge.s32.totalorder %v500, 0
  %vm503 = vcmp.lt.s32.totalorder %v499, 256
  %vm504 = vcmp.lt.s32.totalorder %v500, 256
  %vm505 = vmand %vm501, %vm503
  %vm506 = vmand %vm502, %vm504
  %vm507 = vmand %vm505, %vm410
  %vm508 = vmand %vm506, %vm411
  %v509 = vsel %vm507, %v497, 0.0
  %v510 = vsel %vm508, %v498, 0.0
  %511 = vrot.lane.b32.xlu0 %v366, 112
  %v512 = vpop.permute.xlu0 %511
  %513 = vrot.lane.b32.xlu0 %v367, 112
  %v514 = vpop.permute.xlu0 %513
  %vm515 = vcmp.lt.s32.totalorder %v369, 112
  %v516 = vsel %vm515, %v512, %v514
  %v517 = vsel %vm515, %v514, %v512
  %v518 = vadd.s32 %v369, 16
  %v519 = vadd.s32 %v370, 16
  %vm520 = vcmp.ge.s32.totalorder %v518, 0
  %vm521 = vcmp.ge.s32.totalorder %v519, 0
  %vm522 = vcmp.lt.s32.totalorder %v518, 256
  %vm523 = vcmp.lt.s32.totalorder %v519, 256
  %vm524 = vmand %vm520, %vm522
  %vm525 = vmand %vm521, %vm523
  %v526 = vsel %vm524, %v516, 0.0
  %v527 = vsel %vm525, %v517, 0.0
  %528 = vrot.lane.b32.xlu0 %v366, 111
  %v529 = vpop.permute.xlu0 %528
  %530 = vrot.lane.b32.xlu0 %v367, 111
  %v531 = vpop.permute.xlu0 %530
  %vm532 = vcmp.lt.s32.totalorder %v369, 111
  %v533 = vsel %vm532, %v529, %v531
  %v534 = vsel %vm532, %v531, %v529
  %v535 = vadd.s32 %v369, 17
  %v536 = vadd.s32 %v370, 17
  %vm537 = vcmp.ge.s32.totalorder %v535, 0
  %vm538 = vcmp.ge.s32.totalorder %v536, 0
  %vm539 = vcmp.lt.s32.totalorder %v535, 256
  %vm540 = vcmp.lt.s32.totalorder %v536, 256
  %vm541 = vmand %vm537, %vm539
  %vm542 = vmand %vm538, %vm540
  %vm543 = vmand %vm541, %vm448
  %vm544 = vmand %vm542, %vm449
  %v545 = vsel %vm543, %v533, 0.0
  %v546 = vsel %vm544, %v534, 0.0
  %v547 = vld [vmem:[%s4] sm:$0xff]
  %vm548 = vcmask 596992
  %v550 = vsel %vm548, %v547, 0
  %552 = vmatprep.subr.mxu0 0.0
  %553 = vmatpush1.msra.mxu0 0.0
  %554 = vmatprep.subr.mxu0 0.0
  %555 = vmatpush1.msra.mxu0 0.0
  %556 = vmatprep.subr.mxu0 0.0
  %557 = vmatpush1.msra.mxu0 0.0
  %558 = vmatprep.subr.mxu0 0.0
  %559 = vmatpush1.msra.mxu0 0.0
  %560 = vmatprep.subr.mxu0 0.0
  %561 = vmatpush1.msra.mxu0 0.0
  %562 = vmatprep.subr.mxu0 0.0
  %563 = vmatpush1.msra.mxu0 0.0
  %564 = vmatprep.subr.mxu0 %v35
  %565 = vmatpush1.msra.mxu0 %v35
  %566 = vmatprep.subr.mxu0 %v546
  %567 = vmatpush1.msra.mxu0 %v545
  %568 = vmatprep.subr.mxu0 %v527
  %569 = vmatpush1.msra.mxu0 %v526
  %570 = vmatprep.subr.mxu0 %v510
  %571 = vmatpush1.msra.mxu0 %v509
  %572 = vmatprep.subr.mxu0 %v491
  %573 = vmatpush1.msra.mxu0 %v490
  %574 = vmatprep.subr.mxu0 %v367
  %575 = vmatpush1.msra.mxu0 %v366
  %576 = vmatprep.subr.mxu0 %v472
  %577 = vmatpush1.msra.mxu0 %v471
  %578 = vmatprep.subr.mxu0 %v453
  %579 = vmatpush1.msra.mxu0 %v452
  %580 = vmatprep.subr.mxu0 %v432
  %581 = vmatpush1.msra.mxu0 %v431
  %582 = vmatprep.subr.mxu0 %v415
  %583 = vmatpush1.msra.mxu0 %v414
  %584 = vmatprep.subr.mxu0 0.0
  %585 = vmatpush2.msra.mxu0 0.0
  %586 = vmatprep.subr.mxu0 0.0
  %587 = vmatpush2.msra.mxu0 0.0
  %588 = vmatprep.subr.mxu0 0.0
  %589 = vmatpush2.msra.mxu0 0.0
  %590 = vmatprep.subr.mxu0 0.0
  %591 = vmatpush2.msra.mxu0 0.0
  %592 = vmatprep.subr.mxu0 0.0
  %593 = vmatpush2.msra.mxu0 0.0
  %594 = vmatprep.subr.mxu0 0.0
  %595 = vmatpush2.msra.mxu0 0.0
  %596 = vmatprep.subr.mxu0 0.0
  %597 = vmatpush2.msra.mxu0 0.0
  %598 = vmatprep.subr.mxu0 0.0
  %599 = vmatpush2.msra.mxu0 0.0
  %600 = vmatprep.subr.mxu0 0.0
  %601 = vmatpush2.msra.mxu0 0.0
  %602 = vmatprep.subr.mxu0 0.0
  %603 = vmatpush2.msra.mxu0 0.0
  %604 = vmatprep.subr.mxu0 0.0
  %605 = vmatpush2.msra.mxu0 0.0
  %606 = vmatprep.subr.mxu0 0.0
  %607 = vmatpush2.msra.mxu0 0.0
  %608 = vmatprep.subr.mxu0 0.0
  %609 = vmatpush2.msra.mxu0 0.0
  %610 = vmatprep.subr.mxu0 0.0
  %611 = vmatpush2.msra.mxu0 0.0
  %612 = vmatprep.subr.mxu0 0.0
  %613 = vmatpush2.msra.mxu0 0.0
  %614 = vmatprep.subr.mxu0 0.0
  %615 = vmatpush2.msra.mxu0 0.0
  %616 = vmatprep.mubr.f32.mxu0 0.0
  %617 = vmatmul.mubr.f32.gmra.mxu0 %v550
  %v618 = vpop.f32.mrf.mxu0
  %v619 = vadd.f32 0.0, %v618
  %v620 = vpop.f32.mrf.mxu0
  %v621 = vadd.f32 0.0, %v620
  %622 = vdwg.mxu0
  %v623 = vmax.f32 %v619, 0.0
  %v624 = vmax.f32 %v621, 0.0
  %625 = vst [vmem:[%s5] sm:$0xff] %v623
  %626 = vst [vmem:[%s5 + $0x8] sm:$0xff] %v624
  // Predicated region
  $region22: #{simple_clm_forward.1} parent=0 // pred_check
    _
  $region23: #{simple_clm_forward.1} parent=0 // pred_check_branch
    %628 = sbr.rel (0) target = $region25
  $region24: #{simple_clm_forward.1} parent=0 // pred_region
    _
  $region25: #{simple_clm_forward.1} parent=0 // pred_fallthru
    _
  // Predicated region
  $region26: #{simple_clm_forward.1} parent=0 // pred_check
    _
  $region27: #{simple_clm_forward.1} parent=0 // pred_check_branch
    %630 = sbr.rel (0) target = $region29
  $region28: #{simple_clm_forward.1} parent=0 // pred_region
    _
  $region29: #{simple_clm_forward.1} parent=0 // pred_fallthru
    _

</llo_original>
